<compile_context>
chip_gen: v7x
topology: tpu7x:2x2x1
jax: 0.10.0
libtpu: 0.0.40
codegen_flags: <defaults>
</compile_context>

<pallas_src>
import functools

import jax
import jax.numpy as jnp
from jax.experimental import pallas as pl
from jax.experimental.pallas import tpu as pltpu


def weightnet_kernel(x_ref, w1_ref, b1_ref, w2_ref, b2_ref, out_ref, *, o6):
    # ---- fc1 + ReLU : bf16 operands on the MXU, f32 accumulate/epilogue ----
    h1 = jnp.dot(x_ref[...], w1_ref[...], preferred_element_type=jnp.float32)
    h1 = jnp.maximum(h1 + b1_ref[...], 0.0)

    # ---- fc_weight : bf16 operands, f32 accumulate ----
    logits = jnp.dot(h1.astype(w2_ref.dtype), w2_ref[...],
                     preferred_element_type=jnp.float32)
    logits = logits + b2_ref[...]                  # (TB, o3), o3 == 2 * o6

    # ---- grouped softmax ----
    # view(-1, o6) + softmax(dim=1) + view(-1, o3) == independent softmax over
    # the two o6-wide halves of the last axis.  Per-group max/sum are computed
    # with masked reductions and broadcast back via a lane-index select, so the
    # result is written with a single full-tile store (no masked sliced writes
    # at a non-lane-aligned offset).
    lane = jax.lax.broadcasted_iota(jnp.int32, logits.shape, dimension=1)
    in_left = lane < o6
    neg_inf = jnp.float32(-jnp.inf)

    m_l = jnp.max(jnp.where(in_left, logits, neg_inf), axis=-1, keepdims=True)
    m_r = jnp.max(jnp.where(in_left, neg_inf, logits), axis=-1, keepdims=True)
    m = jnp.where(in_left, m_l, m_r)

    e = jnp.exp(logits - m)
    s_l = jnp.sum(jnp.where(in_left, e, 0.0), axis=-1, keepdims=True)
    s_r = jnp.sum(jnp.where(in_left, 0.0, e), axis=-1, keepdims=True)
    s = jnp.where(in_left, s_l, s_r)

    out_ref[...] = (e * pl.reciprocal(s, approx=True)).astype(out_ref.dtype)


def weightnet_forward(x, w1, b1, w2, b2, out_dim, *, block_b=256):
    assert out_dim % 6 == 0, "out_dim must be divisible by 6"
    B, input_dim = x.shape
    hidden = w1.shape[1]
    o3 = out_dim // 3
    o6 = out_dim // 6
    assert w2.shape == (hidden, o3) and b2.shape[-1] == o3

    # Batch tile: largest requested tile that fits, kept a multiple of 8
    # (sublane) unless it covers the full batch.
    TB = min(block_b, B)
    if TB != B:
        TB = max(8, (TB // 8) * 8)
    num_blocks = pl.cdiv(B, TB)

    # bf16 operands for the MXU; f32 biases for the epilogue.
    x_bf = x.astype(jnp.bfloat16)
    w1_bf = w1.astype(jnp.bfloat16)
    w2_bf = w2.astype(jnp.bfloat16)
    b1_f = b1.reshape(1, hidden).astype(jnp.float32)
    b2_f = b2.reshape(1, o3).astype(jnp.float32)

    flops = 2 * B * (input_dim * hidden + hidden * o3)
    bytes_accessed = (x_bf.size * 2 + w1_bf.size * 2 + w2_bf.size * 2
                      + b1_f.size * 4 + b2_f.size * 4 + B * o3 * 4)
    cost = pl.CostEstimate(flops=flops,
                           transcendentals=B * o3,
                           bytes_accessed=bytes_accessed)

    kernel = functools.partial(weightnet_kernel, o6=o6)

    return pl.pallas_call(
        kernel,
        out_shape=jax.ShapeDtypeStruct((B, o3), jnp.float32),
        grid=(num_blocks,),
        in_specs=[
            pl.BlockSpec((TB, input_dim), lambda i: (i, 0)),   # x streams
            pl.BlockSpec((input_dim, hidden), lambda i: (0, 0)),  # resident
            pl.BlockSpec((1, hidden), lambda i: (0, 0)),          # resident
            pl.BlockSpec((hidden, o3), lambda i: (0, 0)),         # resident
            pl.BlockSpec((1, o3), lambda i: (0, 0)),              # resident
        ],
        out_specs=pl.BlockSpec((TB, o3), lambda i: (i, 0)),
        compiler_params=pltpu.CompilerParams(
            dimension_semantics=("parallel",),   # v7x: shard batch over 2 TCs
            vmem_limit_bytes=32 * 1024 * 1024,   # safe on v5e/v6e/v7x
        ),
        cost_estimate=cost,
    )(x_bf, w1_bf, b1_f, w2_bf, b2_f)


def reference_forward(x, w1, b1, w2, b2, out_dim):
    o3, o6 = out_dim // 3, out_dim // 6
    h1 = jax.nn.relu(x @ w1 + b1)
    logits = h1 @ w2 + b2
    w = jax.nn.softmax(logits.reshape(-1, o6), axis=1)
    return w.reshape(-1, o3)


if __name__ == "__main__":
    # Small shapes consistent with the module.
    B = 64
    input_dim = 32
    hidden_dim = 64
    out_dim = 24          # out_dim//3 = 8, out_dim//6 = 4

    key = jax.random.PRNGKey(0)
    k_x, k_w1, k_b1, k_w2, k_b2 = jax.random.split(key, 5)

    x = jax.random.normal(k_x, (B, input_dim), dtype=jnp.float32)
    # PyTorch Linear weights are (out, in); we build them pre-transposed (in, out).
    w1 = jax.random.normal(k_w1, (input_dim, hidden_dim), dtype=jnp.float32) * 0.1
    b1 = jax.random.normal(k_b1, (1, hidden_dim), dtype=jnp.float32) * 0.1
    w2 = jax.random.normal(k_w2, (hidden_dim, out_dim // 3), dtype=jnp.float32) * 0.1
    b2 = jax.random.normal(k_b2, (1, out_dim // 3), dtype=jnp.float32) * 0.1

    # block_b=16 so the batch grid actually has several pipelined steps here.
    out = weightnet_forward(x, w1, b1, w2, b2, out_dim, block_b=16)
    out = jax.block_until_ready(out)

    ref = reference_forward(x, w1, b1[0], w2, b2[0], out_dim)
    assert out.shape == (B, out_dim // 3), out.shape
    # Looser tolerance: bf16 MXU operands + approx reciprocal vs f32 reference.
    assert jnp.allclose(out, ref, atol=2e-2, rtol=2e-2), "mismatch vs reference"
    # Each softmax group must still sum to ~1.
    sums = out.reshape(-1, out_dim // 6).sum(axis=-1)
    assert jnp.allclose(sums, 1.0, atol=1e-2), "softmax groups do not sum to 1"

    print("KERNEL_OK")
</pallas_src>

<mosaic_0001>
module attributes {stable_mosaic.version = 11 : i64} {
  func.func @weightnet_kernel(%arg0: i32, %arg1: memref<16x32xbf16, #tpu.memory_space<vmem>>, %arg2: memref<32x64xbf16, #tpu.memory_space<vmem>>, %arg3: memref<1x64xf32, #tpu.memory_space<vmem>>, %arg4: memref<64x8xbf16, #tpu.memory_space<vmem>>, %arg5: memref<1x8xf32, #tpu.memory_space<vmem>>, %arg6: memref<16x8xf32, #tpu.memory_space<vmem>>) attributes {dimension_semantics = [#tpu.dimension_semantics<parallel>], iteration_bounds = array<i64: 4>, scalar_prefetch = 0 : i64, scratch_operands = 0 : i64, tpu.core_type = #tpu.core_type<tc>, window_params = [{transform_indices = @transform_0, window_bounds = array<i64: 16, 32>}, {pipeline_mode = #tpu.pipeline_mode<synchronous>, transform_indices = @transform_1, window_bounds = array<i64: 32, 64>}, {pipeline_mode = #tpu.pipeline_mode<synchronous>, transform_indices = @transform_2, window_bounds = array<i64: 1, 64>}, {pipeline_mode = #tpu.pipeline_mode<synchronous>, transform_indices = @transform_3, window_bounds = array<i64: 64, 8>}, {pipeline_mode = #tpu.pipeline_mode<synchronous>, transform_indices = @transform_4, window_bounds = array<i64: 1, 8>}, {transform_indices = @transform_5, window_bounds = array<i64: 16, 8>}]} {
    %c0 = arith.constant 0 : index
    %c0_0 = arith.constant 0 : index
    %0 = vector.load %arg1[%c0, %c0_0] : memref<16x32xbf16, #tpu.memory_space<vmem>>, vector<16x32xbf16>
    %c0_1 = arith.constant 0 : index
    %c0_2 = arith.constant 0 : index
    %1 = vector.load %arg2[%c0_1, %c0_2] : memref<32x64xbf16, #tpu.memory_space<vmem>>, vector<32x64xbf16>
    %cst = arith.constant dense<0.000000e+00> : vector<16x64xf32>
    %2 = tpu.matmul %0, %1, %cst {dimension_numbers = #tpu.dot_dimension_numbers<[1], [0], [0], [1], [0, 0, 1, 1], [], []>} : vector<16x32xbf16>, vector<32x64xbf16>, vector<16x64xf32> -> vector<16x64xf32>
    %c0_3 = arith.constant 0 : index
    %c0_4 = arith.constant 0 : index
    %3 = vector.load %arg3[%c0_3, %c0_4] : memref<1x64xf32, #tpu.memory_space<vmem>>, vector<1x64xf32>
    %4 = vector.broadcast %3 : vector<1x64xf32> to vector<16x64xf32>
    %5 = arith.addf %2, %4 : vector<16x64xf32>
    %cst_5 = arith.constant 0.000000e+00 : f32
    %6 = vector.broadcast %cst_5 : f32 to vector<16x64xf32>
    %7 = arith.maximumf %5, %6 : vector<16x64xf32>
    %8 = arith.truncf %7 : vector<16x64xf32> to vector<16x64xbf16>
    %c0_6 = arith.constant 0 : index
    %c0_7 = arith.constant 0 : index
    %9 = vector.load %arg4[%c0_6, %c0_7] : memref<64x8xbf16, #tpu.memory_space<vmem>>, vector<64x8xbf16>
    %cst_8 = arith.constant dense<0.000000e+00> : vector<16x8xf32>
    %10 = tpu.matmul %8, %9, %cst_8 {dimension_numbers = #tpu.dot_dimension_numbers<[1], [0], [0], [1], [0, 0, 1, 1], [], []>} : vector<16x64xbf16>, vector<64x8xbf16>, vector<16x8xf32> -> vector<16x8xf32>
    %c0_9 = arith.constant 0 : index
    %c0_10 = arith.constant 0 : index
    %11 = vector.load %arg5[%c0_9, %c0_10] : memref<1x8xf32, #tpu.memory_space<vmem>>, vector<1x8xf32>
    %12 = vector.broadcast %11 : vector<1x8xf32> to vector<16x8xf32>
    %13 = arith.addf %10, %12 : vector<16x8xf32>
    %14 = tpu.iota {dimensions = array<i32: 1>} : vector<16x8xi32>
    %c4_i32 = arith.constant 4 : i32
    %15 = vector.broadcast %c4_i32 : i32 to vector<16x8xi32>
    %16 = arith.cmpi slt, %14, %15 : vector<16x8xi32>
    %cst_11 = arith.constant 0xFF800000 : f32
    %17 = vector.broadcast %cst_11 : f32 to vector<16x8xf32>
    %18 = arith.select %16, %13, %17 : vector<16x8xi1>, vector<16x8xf32>
    %cst_12 = arith.constant dense<0xFF800000> : vector<16xf32>
    %19 = vector.multi_reduction <maximumf>, %18, %cst_12 [1] : vector<16x8xf32> to vector<16xf32>
    %20 = vector.shape_cast %19 : vector<16xf32> to vector<16x1xf32>
    %cst_13 = arith.constant 0xFF800000 : f32
    %21 = vector.broadcast %cst_13 : f32 to vector<16x8xf32>
    %22 = arith.select %16, %21, %13 : vector<16x8xi1>, vector<16x8xf32>
    %cst_14 = arith.constant dense<0xFF800000> : vector<16xf32>
    %23 = vector.multi_reduction <maximumf>, %22, %cst_14 [1] : vector<16x8xf32> to vector<16xf32>
    %24 = vector.shape_cast %23 : vector<16xf32> to vector<16x1xf32>
    %25 = vector.shape_cast %20 : vector<16x1xf32> to vector<16x1xf32>
    %26 = vector.broadcast %25 : vector<16x1xf32> to vector<16x8xf32>
    %27 = vector.shape_cast %24 : vector<16x1xf32> to vector<16x1xf32>
    %28 = vector.broadcast %27 : vector<16x1xf32> to vector<16x8xf32>
    %29 = arith.select %16, %26, %28 : vector<16x8xi1>, vector<16x8xf32>
    %30 = arith.subf %13, %29 : vector<16x8xf32>
    %31 = math.exp %30 : vector<16x8xf32>
    %cst_15 = arith.constant 0.000000e+00 : f32
    %32 = vector.broadcast %cst_15 : f32 to vector<16x8xf32>
    %33 = arith.select %16, %31, %32 : vector<16x8xi1>, vector<16x8xf32>
    %cst_16 = arith.constant dense<0.000000e+00> : vector<16xf32>
    %34 = vector.multi_reduction <add>, %33, %cst_16 [1] : vector<16x8xf32> to vector<16xf32>
    %35 = vector.shape_cast %34 : vector<16xf32> to vector<16x1xf32>
    %cst_17 = arith.constant 0.000000e+00 : f32
    %36 = vector.broadcast %cst_17 : f32 to vector<16x8xf32>
    %37 = arith.select %16, %36, %31 : vector<16x8xi1>, vector<16x8xf32>
    %cst_18 = arith.constant dense<0.000000e+00> : vector<16xf32>
    %38 = vector.multi_reduction <add>, %37, %cst_18 [1] : vector<16x8xf32> to vector<16xf32>
    %39 = vector.shape_cast %38 : vector<16xf32> to vector<16x1xf32>
    %40 = vector.shape_cast %35 : vector<16x1xf32> to vector<16x1xf32>
    %41 = vector.broadcast %40 : vector<16x1xf32> to vector<16x8xf32>
    %42 = vector.shape_cast %39 : vector<16x1xf32> to vector<16x1xf32>
    %43 = vector.broadcast %42 : vector<16x1xf32> to vector<16x8xf32>
    %44 = arith.select %16, %41, %43 : vector<16x8xi1>, vector<16x8xf32>
    %45 = tpu.reciprocal %44 {approx = true} : vector<16x8xf32> -> vector<16x8xf32>
    %46 = arith.mulf %31, %45 : vector<16x8xf32>
    %c0_19 = arith.constant 0 : index
    %c0_20 = arith.constant 0 : index
    %47 = vector.load %arg6[%c0_19, %c0_20] : memref<16x8xf32, #tpu.memory_space<vmem>>, vector<16x8xf32>
    tpu.vector_store %arg6[%c0_19, %c0_20], %46 {strides = array<i32>} : memref<16x8xf32, #tpu.memory_space<vmem>>, vector<16x8xf32>,
    return
  }
  func.func @transform_0(%arg0: i32) -> (i32, i32) {
    %c0_i32 = arith.constant 0 : i32
    %c0_i32_0 = arith.constant 0 : i32
    return %arg0, %c0_i32 : i32, i32
  }
  func.func @transform_1(%arg0: i32) -> (i32, i32) {
    %c0_i32 = arith.constant 0 : i32
    %c0_i32_0 = arith.constant 0 : i32
    %c0_i32_1 = arith.constant 0 : i32
    return %c0_i32, %c0_i32_0 : i32, i32
  }
  func.func @transform_2(%arg0: i32) -> (i32, i32) {
    %c0_i32 = arith.constant 0 : i32
    %c0_i32_0 = arith.constant 0 : i32
    %c0_i32_1 = arith.constant 0 : i32
    return %c0_i32, %c0_i32_0 : i32, i32
  }
  func.func @transform_3(%arg0: i32) -> (i32, i32) {
    %c0_i32 = arith.constant 0 : i32
    %c0_i32_0 = arith.constant 0 : i32
    %c0_i32_1 = arith.constant 0 : i32
    return %c0_i32, %c0_i32_0 : i32, i32
  }
  func.func @transform_4(%arg0: i32) -> (i32, i32) {
    %c0_i32 = arith.constant 0 : i32
    %c0_i32_0 = arith.constant 0 : i32
    %c0_i32_1 = arith.constant 0 : i32
    return %c0_i32, %c0_i32_0 : i32, i32
  }
  func.func @transform_5(%arg0: i32) -> (i32, i32) {
    %c0_i32 = arith.constant 0 : i32
    %c0_i32_0 = arith.constant 0 : i32
    return %arg0, %c0_i32 : i32, i32
  }
}

</mosaic_0001>

<llo_original>
// kernel: tpu_custom_call.1
$region0: #{tpu_custom_call.1}
  #allocation0 [shape = 'u32[]', space=smem, size = 0x4, offset = 0x4, fixed_abs, tag = 'smem constant byte address 0x4 - core index']
  #allocation1 [shape = 'u32[144,128]{1,0:T(1,128)}', space=vmem, size = 0x12000, scoped, tag = 'internal scratch']
  %s0 = inlined_call_operand.vmem [shape: bf16[64,32], index: 0, kind: input, shape index: {}]
  %s1 = inlined_call_operand.vmem [shape: bf16[32,64], index: 1, kind: input, shape index: {}]
  %s2 = inlined_call_operand.vmem [shape: f32[1,64], index: 2, kind: input, shape index: {}]
  %s3 = inlined_call_operand.vmem [shape: bf16[64,8], index: 3, kind: input, shape index: {}]
  %s4 = inlined_call_operand.vmem [shape: f32[1,8], index: 4, kind: input, shape index: {}]
  %s5 = inlined_call_operand.vmem [shape: f32[64,8], index: 5, kind: output, shape index: {}]
  %s6 = sld [smem:[#allocation0]]
  $region53: #{tpu_custom_call.1} parent=0
    _
  %s8 = ssub.s32 1, %s6
  %s9 = scalar_select 0, %s8, %s6
  loop: start=0, step=1, limit=6
  $region2: #{tpu_custom_call.1} parent=0 // loop_pre_header
    _
  $region3: #{tpu_custom_call.1} parent=0 // loop_header
    %s11 = sphi 0, %s15
    %p12 = scmp.ge.s32.totalorder %s11, 6
    %s21 = sphi 0, %s23
    %s24 = sphi 0, %s21
    %s25 = sphi 0, %s24
    %s41 = sphi 0, %s25
    %s45 = sphi 0, %s45
    %s47 = sphi 0, %s45
    %s48 = sphi 0, %s47
    %s62 = sphi 0, %s48
    %s66 = sphi 0, %s66
    %s68 = sphi 0, %s66
    %s69 = sphi 0, %s68
    %s83 = sphi 0, %s69
    %s87 = sphi 0, %s87
    %s89 = sphi 0, %s87
    %s90 = sphi 0, %s89
    %s104 = sphi 0, %s90
    %s108 = sphi 0, %s108
    %s110 = sphi 0, %s108
    %s111 = sphi 0, %s110
    %s125 = sphi 0, %s111
    %s131 = sphi 0, %s133
    %s134 = sphi 0, %s131
    %s135 = sphi 0, %s134
    %s151 = sphi 0, %s135
  $region4: #{tpu_custom_call.1} parent=0 // loop_header_branch
    %14 = sbr.rel (%p12) target = $region8
  $region5: #{tpu_custom_call.1} parent=0 // loop_body
    %s16 = ssub.s32 %s11, 1
    %s17 = ssub.s32 %s11, 2
    %s18 = sadd.s32 %s11, 1
    %s19 = ssub.s32 %s11, %s18
    %p20 = scmp.eq.s32.totalorder %s19, 0
    %s22 = sadd.s32 %s21, 1
    %s23 = scalar_select %p20, %s21, %s22
    %p26 = pneg %p20
    %p27 = scmp.eq.s32.totalorder %s11, 3
    %p28 = por %p26, %p27
    %p29 = scmp.ne.s32.totalorder %s21, %s24
    %p30 = scmp.eq.s32.totalorder %s11, 0
    %p31 = por %p29, %p30
    %p32 = scmp.ne.s32.totalorder %s21, %s24
    %p33 = scmp.eq.s32.totalorder %s16, 3
    %p34 = por %p32, %p33
    %p35 = scmp.ne.s32.totalorder %s24, %s25
    %p36 = scmp.eq.s32.totalorder %s16, 0
    %p37 = por %p35, %p36
    %p38 = scmp.ne.s32.totalorder %s24, %s25
    %p39 = scmp.eq.s32.totalorder %s17, 3
    %p40 = por %p38, %p39
    %p42 = scmp.ne.s32.totalorder %s25, %s41
    %p43 = scmp.eq.s32.totalorder %s17, 0
    %p44 = por %p42, %p43
    %s46 = sadd.s32 %s45, 1
    %p49 = scmp.eq.s32.totalorder %s11, 3
    %p50 = scmp.ne.s32.totalorder %s45, %s47
    %p51 = scmp.eq.s32.totalorder %s11, 0
    %p52 = por %p50, %p51
    %p53 = scmp.ne.s32.totalorder %s45, %s47
    %p54 = scmp.eq.s32.totalorder %s16, 3
    %p55 = por %p53, %p54
    %p56 = scmp.ne.s32.totalorder %s47, %s48
    %p57 = scmp.eq.s32.totalorder %s16, 0
    %p58 = por %p56, %p57
    %p59 = scmp.ne.s32.totalorder %s47, %s48
    %p60 = scmp.eq.s32.totalorder %s17, 3
    %p61 = por %p59, %p60
    %p63 = scmp.ne.s32.totalorder %s48, %s62
    %p64 = scmp.eq.s32.totalorder %s17, 0
    %p65 = por %p63, %p64
    %s67 = sadd.s32 %s66, 1
    %p70 = scmp.eq.s32.totalorder %s11, 3
    %p71 = scmp.ne.s32.totalorder %s66, %s68
    %p72 = scmp.eq.s32.totalorder %s11, 0
    %p73 = por %p71, %p72
    %p74 = scmp.ne.s32.totalorder %s66, %s68
    %p75 = scmp.eq.s32.totalorder %s16, 3
    %p76 = por %p74, %p75
    %p77 = scmp.ne.s32.totalorder %s68, %s69
    %p78 = scmp.eq.s32.totalorder %s16, 0
    %p79 = por %p77, %p78
    %p80 = scmp.ne.s32.totalorder %s68, %s69
    %p81 = scmp.eq.s32.totalorder %s17, 3
    %p82 = por %p80, %p81
    %p84 = scmp.ne.s32.totalorder %s69, %s83
    %p85 = scmp.eq.s32.totalorder %s17, 0
    %p86 = por %p84, %p85
    %s88 = sadd.s32 %s87, 1
    %p91 = scmp.eq.s32.totalorder %s11, 3
    %p92 = scmp.ne.s32.totalorder %s87, %s89
    %p93 = scmp.eq.s32.totalorder %s11, 0
    %p94 = por %p92, %p93
    %p95 = scmp.ne.s32.totalorder %s87, %s89
    %p96 = scmp.eq.s32.totalorder %s16, 3
    %p97 = por %p95, %p96
    %p98 = scmp.ne.s32.totalorder %s89, %s90
    %p99 = scmp.eq.s32.totalorder %s16, 0
    %p100 = por %p98, %p99
    %p101 = scmp.ne.s32.totalorder %s89, %s90
    %p102 = scmp.eq.s32.totalorder %s17, 3
    %p103 = por %p101, %p102
    %p105 = scmp.ne.s32.totalorder %s90, %s104
    %p106 = scmp.eq.s32.totalorder %s17, 0
    %p107 = por %p105, %p106
    %s109 = sadd.s32 %s108, 1
    %p112 = scmp.eq.s32.totalorder %s11, 3
    %p113 = scmp.ne.s32.totalorder %s108, %s110
    %p114 = scmp.eq.s32.totalorder %s11, 0
    %p115 = por %p113, %p114
    %p116 = scmp.ne.s32.totalorder %s108, %s110
    %p117 = scmp.eq.s32.totalorder %s16, 3
    %p118 = por %p116, %p117
    %p119 = scmp.ne.s32.totalorder %s110, %s111
    %p120 = scmp.eq.s32.totalorder %s16, 0
    %p121 = por %p119, %p120
    %p122 = scmp.ne.s32.totalorder %s110, %s111
    %p123 = scmp.eq.s32.totalorder %s17, 3
    %p124 = por %p122, %p123
    %p126 = scmp.ne.s32.totalorder %s111, %s125
    %p127 = scmp.eq.s32.totalorder %s17, 0
    %p128 = por %p126, %p127
    %s129 = ssub.s32 %s11, %s18
    %p130 = scmp.eq.s32.totalorder %s129, 0
    %s132 = sadd.s32 %s131, 1
    %s133 = scalar_select %p130, %s131, %s132
    %p136 = pneg %p130
    %p137 = scmp.eq.s32.totalorder %s11, 3
    %p138 = por %p136, %p137
    %p139 = scmp.ne.s32.totalorder %s131, %s134
    %p140 = scmp.eq.s32.totalorder %s11, 0
    %p141 = por %p139, %p140
    %p142 = scmp.ne.s32.totalorder %s131, %s134
    %p143 = scmp.eq.s32.totalorder %s16, 3
    %p144 = por %p142, %p143
    %p145 = scmp.ne.s32.totalorder %s134, %s135
    %p146 = scmp.eq.s32.totalorder %s16, 0
    %p147 = por %p145, %p146
    %p148 = scmp.ne.s32.totalorder %s134, %s135
    %p149 = scmp.eq.s32.totalorder %s17, 3
    %p150 = por %p148, %p149
    %p152 = scmp.ne.s32.totalorder %s135, %s151
    %p153 = scmp.eq.s32.totalorder %s17, 0
    %p154 = por %p152, %p153
    %p155 = scmp.le.s32.totalorder 1, %s11
    %p156 = scmp.lt.s32.totalorder %s11, 5
    %p157 = pnand %p155, %p156
    %p158 = pneg %p157
    // Predicated region
    $region9: #{tpu_custom_call.1} parent=5 // pred_check
      _
    $region10: #{tpu_custom_call.1} parent=5 // pred_check_branch
      %160 = sbr.rel (%p157) target = $region12
    $region11: #{tpu_custom_call.1} parent=5 // pred_region
      %s161 = ssub.s32 %s11, 1
      // Predicated region
      $region13: #{tpu_custom_call.1} parent=11 // pred_check
        %p162 = pneg %p58
      $region14: #{tpu_custom_call.1} parent=11 // pred_check_branch
        %164 = sbr.rel (%p162) target = $region16
      $region15: #{tpu_custom_call.1} parent=11 // pred_region
        _
      $region16: #{tpu_custom_call.1} parent=11 // pred_fallthru
        _
      // Predicated region
      $region17: #{tpu_custom_call.1} parent=11 // pred_check
        %p165 = pneg %p79
      $region18: #{tpu_custom_call.1} parent=11 // pred_check_branch
        %167 = sbr.rel (%p165) target = $region20
      $region19: #{tpu_custom_call.1} parent=11 // pred_region
        _
      $region20: #{tpu_custom_call.1} parent=11 // pred_fallthru
        _
      // Predicated region
      $region21: #{tpu_custom_call.1} parent=11 // pred_check
        %p168 = pneg %p100
      $region22: #{tpu_custom_call.1} parent=11 // pred_check_branch
        %170 = sbr.rel (%p168) target = $region24
      $region23: #{tpu_custom_call.1} parent=11 // pred_region
        _
      $region24: #{tpu_custom_call.1} parent=11 // pred_fallthru
        _
      // Predicated region
      $region25: #{tpu_custom_call.1} parent=11 // pred_check
        %p171 = pneg %p121
      $region26: #{tpu_custom_call.1} parent=11 // pred_check_branch
        %173 = sbr.rel (%p171) target = $region28
      $region27: #{tpu_custom_call.1} parent=11 // pred_region
        _
      $region28: #{tpu_custom_call.1} parent=11 // pred_fallthru
        _
    $region12: #{tpu_custom_call.1} parent=5 // pred_fallthru
      _
    %p174 = scmp.lt.s32.totalorder %s11, 4
    // Predicated region
    $region29: #{tpu_custom_call.1} parent=5 // pred_check
      %p175 = pneg %p174
    $region30: #{tpu_custom_call.1} parent=5 // pred_check_branch
      %177 = sbr.rel (%p175) target = $region32
    $region31: #{tpu_custom_call.1} parent=5 // pred_region
      // Predicated region
      $region33: #{tpu_custom_call.1} parent=31 // pred_check
        %p178 = pneg %p31
      $region34: #{tpu_custom_call.1} parent=31 // pred_check_branch
        %180 = sbr.rel (%p178) target = $region36
      $region35: #{tpu_custom_call.1} parent=31 // pred_region
        %s181 = smul.u32 2, %s11
        %p182 = scmp.lt.s32.totalorder %s181, 7
        %s183 = scalar_select %p182, %s181, 7
        %s184 = smul.addr %s183, 4
        %s185 = scalar_lea.vmem %s0, %s184
        %s186 = smul.u32 2, %s11
      $region36: #{tpu_custom_call.1} parent=31 // pred_fallthru
        _
    $region32: #{tpu_custom_call.1} parent=5 // pred_fallthru
      _
    %p187 = scmp.le.s32.totalorder 1, %s11
    %p188 = scmp.lt.s32.totalorder %s11, 5
    %p189 = pnand %p187, %p188
    %p190 = pneg %p189
    // Predicated region
    $region37: #{tpu_custom_call.1} parent=5 // pred_check
      _
    $region38: #{tpu_custom_call.1} parent=5 // pred_check_branch
      %192 = sbr.rel (%p189) target = $region40
    $region39: #{tpu_custom_call.1} parent=5 // pred_region
      %s193 = ssub.s32 %s11, 1
      %s194 = smul.u32 2, %s16
      %p195 = scmp.lt.s32.totalorder %s194, 7
      %s196 = scalar_select %p195, %s194, 7
      %s197 = smul.addr %s196, 4
      %s198 = scalar_lea.vmem %s0, %s197
      %p199 = pneg %p37
      %p200 = pneg %p34
      %p201 = pneg %p58
      %p202 = pneg %p55
      %p203 = pneg %p79
      %p204 = pneg %p76
      %p205 = pneg %p100
      %p206 = pneg %p97
      %p207 = pneg %p121
      %p208 = pneg %p118
      %p209 = pneg %p147
      %p210 = pneg %p144
      %s211 = smul.u32 2, %s16
      %p212 = scmp.lt.s32.totalorder %s211, 7
      %s213 = scalar_select %p212, %s211, 7
      %s214 = smul.addr %s213, 8
      %s215 = scalar_lea.vmem %s5, %s214
      %s216 = smul.u32 2, %s16
      %p217 = scmp.lt.s32.totalorder %s216, 7
      %s218 = scalar_select %p217, %s216, 7
      %s219 = smul.addr %s218, 4
      %s220 = scalar_lea.vmem %s0, %s219
      %s221 = smul.u32 2, %s16
      %s222 = smul.u32 2, %s16
      %p223 = scmp.lt.s32.totalorder %s222, 7
      %s224 = scalar_select %p223, %s222, 7
      %s225 = smul.addr %s224, 8
      %s226 = scalar_lea.vmem %s5, %s225
      %s227 = smul.u32 2, %s16
      %v229 = vld [vmem:[%s220] sm:$0xf]
      %v230 = vld [vmem:[%s220 + $0x4] sm:$0xf]
      %v231 = vld [vmem:[%s1] sm:$0xf]
      %v232 = vld [vmem:[%s1 + $0x4] sm:$0xf]
      %v233 = vld [vmem:[%s1 + $0x8] sm:$0xf]
      %v234 = vld [vmem:[%s1 + $0xc] sm:$0xf]
      %v235 = vld [vmem:[%s2] sm:$0x1]
      %v237 = vlaneseq
      %v238 = vshrl.u32 %v237, 7
      %v239 = vsub.s32 0, %v238
      %v240 = vrot.slane %v235, %v239
      %v244 = vunpack.c.l.b16 %v229
      %v245 = vunpack.c.l.b16 %v230
      %v246 = vpack.c.b16 %v245, %v244
      %v251 = vunpack.c.l.b16 %v231
      %v252 = vunpack.c.l.b16 %v232
      %v253 = vunpack.c.l.b16 %v233
      %v254 = vunpack.c.l.b16 %v234
      %v255 = vpack.c.b16 %v252, %v251
      %v256 = vpack.c.b16 %v254, %v253
      %vm259 = vcmask 261120
      %v261 = vsel %vm259, %v246, 0
      %263 = vmatprep.subr.bf16.mxu0 0
      %264 = vmatpush1.bf16.msra.mxu0 %v255
      %265 = vmatprep.subr.bf16.mxu0 0
      %266 = vmatpush1.bf16.msra.mxu0 %v256
      %267 = vmatprep.subr.bf16.mxu0 0
      %268 = vmatpush1.bf16.msra.mxu0 0
      %269 = vmatprep.subr.bf16.mxu0 0
      %270 = vmatpush1.bf16.msra.mxu0 0
      %271 = vmatprep.subr.bf16.mxu0 0
      %272 = vmatpush1.bf16.msra.mxu0 0
      %273 = vmatprep.subr.bf16.mxu0 0
      %274 = vmatpush1.bf16.msra.mxu0 0
      %275 = vmatprep.subr.bf16.mxu0 0
      %276 = vmatpush1.bf16.msra.mxu0 0
      %277 = vmatprep.subr.bf16.mxu0 0
      %278 = vmatpush1.bf16.msra.mxu0 0
      %279 = vmatprep.subr.bf16.mxu0 0
      %280 = vmatpush1.bf16.msra.mxu0 0
      %281 = vmatprep.subr.bf16.mxu0 0
      %282 = vmatpush1.bf16.msra.mxu0 0
      %283 = vmatprep.subr.bf16.mxu0 0
      %284 = vmatpush1.bf16.msra.mxu0 0
      %285 = vmatprep.subr.bf16.mxu0 0
      %286 = vmatpush1.bf16.msra.mxu0 0
      %287 = vmatprep.subr.bf16.mxu0 0
      %288 = vmatpush1.bf16.msra.mxu0 0
      %289 = vmatprep.subr.bf16.mxu0 0
      %290 = vmatpush1.bf16.msra.mxu0 0
      %291 = vmatprep.subr.bf16.mxu0 0
      %292 = vmatpush1.bf16.msra.mxu0 0
      %293 = vmatprep.subr.bf16.mxu0 0
      %294 = vmatpush1.bf16.msra.mxu0 0
      %295 = vmatprep.mubr.bf16.mxu0 0
      %296 = vmatmul.mubr.bf16.gmra.mrb[0].mxu0 %v261
      %v297 = vpop.f32.mrb[0].mxu0
      %v298 = vadd.f32 %v240, %v297
      %v299 = vpop.f32.mrb[0].mxu0
      %v300 = vpop.f32.mrb[0].mxu0
      %v301 = vadd.f32 %v240, %v300
      %v302 = vpop.f32.mrb[0].mxu0
      %303 = vdwg.mxu0
      %v304 = vmax.f32 %v298, 0.0
      %v305 = vmax.f32 %v301, 0.0
      %v306 = vpack.c.bf16 %v305, %v304
      %v307 = vld [vmem:[%s3] sm:$0xf]
      %v308 = vld [vmem:[%s3 + $0x4] sm:$0xf]
      %v309 = vld [vmem:[%s3 + $0x8] sm:$0xf]
      %v310 = vld [vmem:[%s3 + $0xc] sm:$0xf]
      %v311 = vld [vmem:[%s3 + $0x10] sm:$0xf]
      %v312 = vld [vmem:[%s3 + $0x14] sm:$0xf]
      %v313 = vld [vmem:[%s3 + $0x18] sm:$0xf]
      %v314 = vld [vmem:[%s3 + $0x1c] sm:$0xf]
      %v315 = vld [vmem:[%s4] sm:$0x1]
      %v317 = vlaneseq
      %v318 = vshrl.u32 %v317, 7
      %v319 = vsub.s32 0, %v318
      %v320 = vrot.slane %v315, %v319
      %v330 = vunpack.c.l.b16 %v307
      %v331 = vunpack.c.l.b16 %v308
      %v332 = vunpack.c.l.b16 %v309
      %v333 = vunpack.c.l.b16 %v310
      %v334 = vunpack.c.l.b16 %v311
      %v335 = vunpack.c.l.b16 %v312
      %v336 = vunpack.c.l.b16 %v313
      %v337 = vunpack.c.l.b16 %v314
      %v338 = vpack.c.b16 %v331, %v330
      %v339 = vpack.c.b16 %v333, %v332
      %v340 = vpack.c.b16 %v335, %v334
      %v341 = vpack.c.b16 %v337, %v336
      %vm346 = vcmask 523264
      %v348 = vsel %vm346, %v306, 0
      %350 = vmatprep.subr.bf16.mxu0 0
      %351 = vmatpush1.bf16.msra.mxu0 %v338
      %352 = vmatprep.subr.bf16.mxu0 0
      %353 = vmatpush1.bf16.msra.mxu0 %v339
      %354 = vmatprep.subr.bf16.mxu0 0
      %355 = vmatpush1.bf16.msra.mxu0 %v340
      %356 = vmatprep.subr.bf16.mxu0 0
      %357 = vmatpush1.bf16.msra.mxu0 %v341
      %358 = vmatprep.subr.bf16.mxu0 0
      %359 = vmatpush1.bf16.msra.mxu0 0
      %360 = vmatprep.subr.bf16.mxu0 0
      %361 = vmatpush1.bf16.msra.mxu0 0
      %362 = vmatprep.subr.bf16.mxu0 0
      %363 = vmatpush1.bf16.msra.mxu0 0
      %364 = vmatprep.subr.bf16.mxu0 0
      %365 = vmatpush1.bf16.msra.mxu0 0
      %366 = vmatprep.subr.bf16.mxu0 0
      %367 = vmatpush1.bf16.msra.mxu0 0
      %368 = vmatprep.subr.bf16.mxu0 0
      %369 = vmatpush1.bf16.msra.mxu0 0
      %370 = vmatprep.subr.bf16.mxu0 0
      %371 = vmatpush1.bf16.msra.mxu0 0
      %372 = vmatprep.subr.bf16.mxu0 0
      %373 = vmatpush1.bf16.msra.mxu0 0
      %374 = vmatprep.subr.bf16.mxu0 0
      %375 = vmatpush1.bf16.msra.mxu0 0
      %376 = vmatprep.subr.bf16.mxu0 0
      %377 = vmatpush1.bf16.msra.mxu0 0
      %378 = vmatprep.subr.bf16.mxu0 0
      %379 = vmatpush1.bf16.msra.mxu0 0
      %380 = vmatprep.subr.bf16.mxu0 0
      %381 = vmatpush1.bf16.msra.mxu0 0
      %382 = vmatprep.mubr.bf16.mxu0 0
      %383 = vmatmul.mubr.bf16.gmra.mrb[0].mxu0 %v348
      %v384 = vpop.f32.mrb[0].mxu0
      %v385 = vadd.f32 %v320, %v384
      %v386 = vpop.f32.mrb[0].mxu0
      %v387 = vpop.f32.mrb[0].mxu0
      %v388 = vadd.f32 %v320, %v387
      %v389 = vpop.f32.mrb[0].mxu0
      %390 = vdwg.mxu0
      %v391 = vlaneseq
      %v392 = vand.u32 %v391, 127
      %vm393 = vcmp.lt.s32.totalorder %v392, 4
      %v394 = vsel %vm393, %v385, -inf
      %v395 = vsel %vm393, %v388, -inf
      %vm396 = vcmask 64512
      %v397 = vsel %vm396, %v394, -inf
      %398 = vmax.xlane.f32.xlu0 %v397
      %v399 = vpop.xlane.xlu0 %398
      %v400 = vsel %vm396, %v395, -inf
      %401 = vmax.xlane.f32.xlu0 %v400
      %v402 = vpop.xlane.xlu0 %401
      %v403 = vsel %vm393, -inf, %v385
      %v404 = vsel %vm393, -inf, %v388
      %v405 = vsel %vm396, %v403, -inf
      %406 = vmax.xlane.f32.xlu0 %v405
      %v407 = vpop.xlane.xlu0 %406
      %v408 = vsel %vm396, %v404, -inf
      %409 = vmax.xlane.f32.xlu0 %v408
      %v410 = vpop.xlane.xlu0 %409
      %v411 = vsel %vm393, %v399, %v407
      %v412 = vsel %vm393, %v402, %v410
      %v413 = vsub.f32 %v385, %v411
      %v414 = vsub.f32 %v388, %v412
      %v415 = vmul.f32 %v413, 1.442695
      %v416 = vpow.pop %v415
      %v417 = vmul.f32 %v414, 1.442695
      %v418 = vpow.pop %v417
      %v419 = vsel %vm393, %v416, 0.0
      %v420 = vsel %vm393, %v418, 0.0
      %v421 = vsel %vm396, %v419, 0.0
      %422 = vadd.xlane.f32.xlu0 %v421
      %v423 = vpop.xlane.xlu0 %422
      %v424 = vsel %vm396, %v420, 0.0
      %425 = vadd.xlane.f32.xlu0 %v424
      %v426 = vpop.xlane.xlu0 %425
      %v427 = vsel %vm393, 0.0, %v416
      %v428 = vsel %vm393, 0.0, %v418
      %v429 = vsel %vm396, %v427, 0.0
      %430 = vadd.xlane.f32.xlu0 %v429
      %v431 = vpop.xlane.xlu0 %430
      %v432 = vsel %vm396, %v428, 0.0
      %433 = vadd.xlane.f32.xlu0 %v432
      %v434 = vpop.xlane.xlu0 %433
      %v435 = vsel %vm393, %v423, %v431
      %v436 = vsel %vm393, %v426, %v434
      %v437 = vrcp.pop %v435
      %v438 = vrcp.pop %v436
      %v439 = vmul.f32 %v416, %v437
      %v440 = vmul.f32 %v418, %v438
      %441 = vst.msk [vmem:[%s226] sm:$0xff] %vm396, %v439
      %442 = vst.msk [vmem:[%s226 + $0x8] sm:$0xff] %vm396, %v440
      %s443 = smul.u32 2, %s16
      %p444 = scmp.lt.s32.totalorder %s443, 7
      %s445 = scalar_select %p444, %s443, 7
      %s446 = smul.addr %s445, 8
      %s447 = scalar_lea.vmem %s5, %s446
      // Predicated region
      $region41: #{tpu_custom_call.1} parent=39 // pred_check
        %p448 = pneg %p144
      $region42: #{tpu_custom_call.1} parent=39 // pred_check_branch
        %450 = sbr.rel (%p448) target = $region44
      $region43: #{tpu_custom_call.1} parent=39 // pred_region
        %s451 = smul.u32 2, %s16
      $region44: #{tpu_custom_call.1} parent=39 // pred_fallthru
        _
    $region40: #{tpu_custom_call.1} parent=5 // pred_fallthru
      _
    %p452 = scmp.le.s32.totalorder 2, %s11
    // Predicated region
    $region45: #{tpu_custom_call.1} parent=5 // pred_check
      %p453 = pneg %p452
    $region46: #{tpu_custom_call.1} parent=5 // pred_check_branch
      %455 = sbr.rel (%p453) target = $region48
    $region47: #{tpu_custom_call.1} parent=5 // pred_region
      %s456 = ssub.s32 %s11, 2
      // Predicated region
      $region49: #{tpu_custom_call.1} parent=47 // pred_check
        %p457 = pneg %p150
      $region50: #{tpu_custom_call.1} parent=47 // pred_check_branch
        %459 = sbr.rel (%p457) target = $region52
      $region51: #{tpu_custom_call.1} parent=47 // pred_region
        %s460 = smul.u32 2, %s17
        %p461 = scmp.lt.s32.totalorder %s460, 7
        %s462 = scalar_select %p461, %s460, 7
        %s463 = smul.addr %s462, 8
        %s464 = scalar_lea.vmem %s5, %s463
      $region52: #{tpu_custom_call.1} parent=47 // pred_fallthru
        _
    $region48: #{tpu_custom_call.1} parent=5 // pred_fallthru
      _
  $region6: #{tpu_custom_call.1} parent=0 // loop_footer
    %s15 = sadd.s32 1, %s11
  $region7: #{tpu_custom_call.1} parent=0 // loop_footer_branch
    %10 = sbr.rel target = $region3
  $region8: #{tpu_custom_call.1} parent=0 // loop_exit
    _

</llo_original>
